<compile_context>
chip_gen: v7x
topology: tpu7x:2x2x1
jax: 0.10.0
libtpu: 0.0.40
codegen_flags: <defaults>
</compile_context>

<pallas_src>
import jax
import jax.numpy as jnp
from jax import lax
from jax.experimental import pallas as pl
from jax.experimental.pallas import tpu as pltpu

# ---- model hyperparameters (mirrors bigram.py) ------------------------------
N_EMBED = 64
VOCAB_SIZE = 65   # e.g. len(set(tiny-shakespeare chars)); fixed here
LANE = 128        # TPU lane width


def _round_up(x, m):
    return ((x + m - 1) // m) * m


# ---- Pallas kernel -----------------------------------------------------------
def bigram_kernel(idx_ref, emb_ref, wt_ref, b_ref, out_ref):
    # idx_ref: (TILE_M, 1) int32   -- token ids for this tile
    # emb_ref: (V_pad, E_pad) f32  -- zero-padded embedding table (VMEM-resident)
    # wt_ref:  (E_pad, V_pad) f32  -- zero-padded lm_head weight, transposed
    # b_ref:   (1, V_pad) f32     -- zero-padded lm_head bias
    # out_ref: (TILE_M, V_pad) f32 -- lane-dense logits tile
    tm = out_ref.shape[0]
    v_pad = emb_ref.shape[0]

    tok = idx_ref[...]                                            # (TILE_M, 1)

    # Exact embedding gather as one-hot @ table: one aligned MXU pass.
    vocab_iota = lax.broadcasted_iota(jnp.int32, (tm, v_pad), 1)
    one_hot = (tok == vocab_iota).astype(jnp.float32)             # (TILE_M, V_pad)
    emb = jnp.dot(one_hot, emb_ref[...],
                  preferred_element_type=jnp.float32)             # (TILE_M, E_pad)

    # lm_head projection + bias, fused in the same kernel body.
    out_ref[...] = (jnp.dot(emb, wt_ref[...],
                            preferred_element_type=jnp.float32)
                    + b_ref[...])                                 # (TILE_M, V_pad)


def bigram_forward(idx, emb_table, lm_w, lm_b, targets=None, *, tile_m=128):
    """idx: (B, T) int ids. Returns (logits (B, T, V), loss)."""
    B, T = idx.shape
    V, E = emb_table.shape
    N = B * T

    v_pad = _round_up(V, LANE)
    e_pad = _round_up(E, LANE)

    # ---- zero-pad parameters to lane-aligned shapes (exact: pads contribute 0)
    emb_pad = jnp.zeros((v_pad, e_pad), jnp.float32).at[:V, :E].set(
        emb_table.astype(jnp.float32))
    wt_pad = jnp.zeros((e_pad, v_pad), jnp.float32).at[:E, :V].set(
        lm_w.astype(jnp.float32).T)
    b_pad = jnp.zeros((1, v_pad), jnp.float32).at[0, :V].set(
        lm_b.astype(jnp.float32))

    # ---- pad rows: MXU/sublane-friendly tiles, and >= 2 grid steps so the grid
    # can be sharded across both TensorCores on v7x. Padded rows use token id 0
    # (valid) and are discarded by the wrapper-side slice below.
    n_tiles = max(pl.cdiv(N, tile_m), 2)
    n_pad = n_tiles * tile_m
    idx_flat = jnp.zeros((n_pad, 1), jnp.int32).at[:N, 0].set(
        idx.reshape(N).astype(jnp.int32))

    logits_pad = pl.pallas_call(
        bigram_kernel,
        out_shape=jax.ShapeDtypeStruct((n_pad, v_pad), jnp.float32),
        grid_spec=pltpu.PrefetchScalarGridSpec(
            num_scalar_prefetch=0,
            grid=(n_tiles,),
            in_specs=[
                # Per-tile token ids: tiny per-step DMA, scales with N.
                pl.BlockSpec((tile_m, 1), lambda i: (i, 0)),
                # Parameters: constant block index -> DMA'd once, VMEM-resident
                # across every grid step.
                pl.BlockSpec((v_pad, e_pad), lambda i: (0, 0)),
                pl.BlockSpec((e_pad, v_pad), lambda i: (0, 0)),
                pl.BlockSpec((1, v_pad), lambda i: (0, 0)),
            ],
            out_specs=pl.BlockSpec((tile_m, v_pad), lambda i: (i, 0)),
        ),
        compiler_params=pltpu.CompilerParams(
            dimension_semantics=("parallel",)),
    )(idx_flat, emb_pad, wt_pad, b_pad)

    logits_flat = logits_pad[:N, :V]
    logits = logits_flat.reshape(B, T, V)

    loss = None
    if targets is not None:
        # Cross-entropy glue in plain JAX (matches F.cross_entropy mean reduction).
        tgt = targets.reshape(N).astype(jnp.int32)
        logp = jax.nn.log_softmax(logits_flat, axis=-1)
        loss = -jnp.mean(jnp.take_along_axis(logp, tgt[:, None], axis=-1))
    return logits, loss


# ---- deterministic parameter init + driver ----------------------------------
def init_params(key):
    k_emb, k_w, k_b = jax.random.split(key, 3)
    # nn.Embedding default: N(0, 1)
    emb_table = jax.random.normal(k_emb, (VOCAB_SIZE, N_EMBED), dtype=jnp.float32)
    # nn.Linear default: U(-1/sqrt(fan_in), 1/sqrt(fan_in))
    bound = 1.0 / (N_EMBED ** 0.5)
    lm_w = jax.random.uniform(k_w, (VOCAB_SIZE, N_EMBED), dtype=jnp.float32,
                              minval=-bound, maxval=bound)
    lm_b = jax.random.uniform(k_b, (VOCAB_SIZE,), dtype=jnp.float32,
                              minval=-bound, maxval=bound)
    return emb_table, lm_w, lm_b


if __name__ == "__main__":
    key = jax.random.PRNGKey(0)
    k_params, k_idx, k_tgt = jax.random.split(key, 3)
    emb_table, lm_w, lm_b = init_params(k_params)

    B, T = 2, 8
    idx = jax.random.randint(k_idx, (B, T), 0, VOCAB_SIZE, dtype=jnp.int32)
    targets = jax.random.randint(k_tgt, (B, T), 0, VOCAB_SIZE, dtype=jnp.int32)

    # targets=None path (loss must be None)
    logits, loss_none = bigram_forward(idx, emb_table, lm_w, lm_b, targets=None)
    logits = jax.block_until_ready(logits)

    # sanity check against a pure-JAX reference
    ref = emb_table[idx] @ lm_w.T + lm_b
    assert logits.shape == (B, T, VOCAB_SIZE)
    assert jnp.allclose(logits, ref, atol=1e-4, rtol=1e-4)
    assert loss_none is None

    # targets path (cross-entropy glue)
    logits2, loss = bigram_forward(idx, emb_table, lm_w, lm_b, targets=targets)
    loss = jax.block_until_ready(loss)
    assert jnp.isfinite(loss)

    # TODO(synk): generate()'s multinomial sampling loop is host-side control flow
    # and is intentionally not implemented as a kernel.
    print("KERNEL_OK")
</pallas_src>

<mosaic_0001>
module attributes {stable_mosaic.version = 11 : i64} {
  func.func @bigram_kernel(%arg0: i32, %arg1: memref<128x1xi32, #tpu.memory_space<vmem>>, %arg2: memref<128x128xf32, #tpu.memory_space<vmem>>, %arg3: memref<128x128xf32, #tpu.memory_space<vmem>>, %arg4: memref<1x128xf32, #tpu.memory_space<vmem>>, %arg5: memref<128x128xf32, #tpu.memory_space<vmem>>) attributes {dimension_semantics = [#tpu.dimension_semantics<parallel>], iteration_bounds = array<i64: 2>, scalar_prefetch = 0 : i64, scratch_operands = 0 : i64, tpu.core_type = #tpu.core_type<tc>, window_params = [{transform_indices = @transform_0, window_bounds = array<i64: 128, 1>}, {pipeline_mode = #tpu.pipeline_mode<synchronous>, transform_indices = @transform_1, window_bounds = array<i64: 128, 128>}, {pipeline_mode = #tpu.pipeline_mode<synchronous>, transform_indices = @transform_2, window_bounds = array<i64: 128, 128>}, {pipeline_mode = #tpu.pipeline_mode<synchronous>, transform_indices = @transform_3, window_bounds = array<i64: 1, 128>}, {transform_indices = @transform_4, window_bounds = array<i64: 128, 128>}]} {
    %c0 = arith.constant 0 : index
    %c0_0 = arith.constant 0 : index
    %0 = vector.load %arg1[%c0, %c0_0] : memref<128x1xi32, #tpu.memory_space<vmem>>, vector<128x1xi32>
    %1 = tpu.iota {dimensions = array<i32: 1>} : vector<128x128xi32>
    %2 = vector.broadcast %0 : vector<128x1xi32> to vector<128x128xi32>
    %3 = arith.cmpi eq, %2, %1 : vector<128x128xi32>
    %4 = arith.extui %3 : vector<128x128xi1> to vector<128x128xi32>
    %5 = arith.sitofp %4 : vector<128x128xi32> to vector<128x128xf32>
    %c0_1 = arith.constant 0 : index
    %c0_2 = arith.constant 0 : index
    %6 = vector.load %arg2[%c0_1, %c0_2] : memref<128x128xf32, #tpu.memory_space<vmem>>, vector<128x128xf32>
    %cst = arith.constant dense<0.000000e+00> : vector<128x128xf32>
    %7 = tpu.matmul %5, %6, %cst {dimension_numbers = #tpu.dot_dimension_numbers<[1], [0], [0], [1], [0, 0, 1, 1], [], []>} : vector<128x128xf32>, vector<128x128xf32>, vector<128x128xf32> -> vector<128x128xf32>
    %c0_3 = arith.constant 0 : index
    %c0_4 = arith.constant 0 : index
    %8 = vector.load %arg3[%c0_3, %c0_4] : memref<128x128xf32, #tpu.memory_space<vmem>>, vector<128x128xf32>
    %cst_5 = arith.constant dense<0.000000e+00> : vector<128x128xf32>
    %9 = tpu.matmul %7, %8, %cst_5 {dimension_numbers = #tpu.dot_dimension_numbers<[1], [0], [0], [1], [0, 0, 1, 1], [], []>} : vector<128x128xf32>, vector<128x128xf32>, vector<128x128xf32> -> vector<128x128xf32>
    %c0_6 = arith.constant 0 : index
    %c0_7 = arith.constant 0 : index
    %10 = vector.load %arg4[%c0_6, %c0_7] : memref<1x128xf32, #tpu.memory_space<vmem>>, vector<1x128xf32>
    %11 = vector.broadcast %10 : vector<1x128xf32> to vector<128x128xf32>
    %12 = arith.addf %9, %11 : vector<128x128xf32>
    %c0_8 = arith.constant 0 : index
    %c0_9 = arith.constant 0 : index
    %13 = vector.load %arg5[%c0_8, %c0_9] : memref<128x128xf32, #tpu.memory_space<vmem>>, vector<128x128xf32>
    tpu.vector_store %arg5[%c0_8, %c0_9], %12 {strides = array<i32>} : memref<128x128xf32, #tpu.memory_space<vmem>>, vector<128x128xf32>,
    return
  }
  func.func @transform_0(%arg0: i32) -> (i32, i32) {
    %c0_i32 = arith.constant 0 : i32
    %c0_i32_0 = arith.constant 0 : i32
    return %arg0, %c0_i32 : i32, i32
  }
  func.func @transform_1(%arg0: i32) -> (i32, i32) {
    %c0_i32 = arith.constant 0 : i32
    %c0_i32_0 = arith.constant 0 : i32
    %c0_i32_1 = arith.constant 0 : i32
    return %c0_i32, %c0_i32_0 : i32, i32
  }
  func.func @transform_2(%arg0: i32) -> (i32, i32) {
    %c0_i32 = arith.constant 0 : i32
    %c0_i32_0 = arith.constant 0 : i32
    %c0_i32_1 = arith.constant 0 : i32
    return %c0_i32, %c0_i32_0 : i32, i32
  }
  func.func @transform_3(%arg0: i32) -> (i32, i32) {
    %c0_i32 = arith.constant 0 : i32
    %c0_i32_0 = arith.constant 0 : i32
    %c0_i32_1 = arith.constant 0 : i32
    return %c0_i32, %c0_i32_0 : i32, i32
  }
  func.func @transform_4(%arg0: i32) -> (i32, i32) {
    %c0_i32 = arith.constant 0 : i32
    %c0_i32_0 = arith.constant 0 : i32
    return %arg0, %c0_i32 : i32, i32
  }
}

</mosaic_0001>

<llo_original>
// kernel: tpu_custom_call.1
$region0: #{tpu_custom_call.1}
  #allocation0 [shape = 'u32[]', space=smem, size = 0x4, offset = 0x4, fixed_abs, tag = 'smem constant byte address 0x4 - core index']
  #allocation1 [shape = 'u32[144,128]{1,0:T(1,128)}', space=vmem, size = 0x12000, scoped, tag = 'internal scratch']
  %s0 = inlined_call_operand.vmem [shape: s32[256,1], index: 0, kind: input, shape index: {}]
  %s1 = inlined_call_operand.vmem [shape: f32[128,128], index: 1, kind: input, shape index: {}]
  %s2 = inlined_call_operand.vmem [shape: f32[128,128], index: 2, kind: input, shape index: {}]
  %s3 = inlined_call_operand.vmem [shape: f32[1,128], index: 3, kind: input, shape index: {}]
  %s4 = inlined_call_operand.hbm [shape: f32[256,128], index: 4, kind: output, shape index: {}]
  %s5 = sld [smem:[#allocation0]]
  $region49: #{tpu_custom_call.1} parent=0
    _
  %s7 = ssub.s32 1, %s5
  %s8 = scalar_select 0, %s7, %s5
  $region1: #{tpu_custom_call.1} parent=0
    #allocation2 [shape = 'u8[131072]{0}', space=vmem, size = 0x20000, scoped, tag = 'output window, operand 0']
    #allocation3 [shape = 's32[2]{0}', space=sflag, size = 0x8, scoped, tag = 'scoped memory for tpu_custom_call.1']
    %9 = vsyncpa [#allocation3], 0
    %s10 = scalar_lea.sflag [#allocation3], 1
    %11 = vsyncpa %s10, 0
    loop: start=0, step=1, limit=4
    $region2: #{tpu_custom_call.1} parent=1 // loop_pre_header
      _
    $region3: #{tpu_custom_call.1} parent=1 // loop_header
      %s13 = sphi 0, %s17
      %p14 = scmp.ge.s32.totalorder %s13, 4
      %s23 = sphi 0, %s25
      %s26 = sphi 0, %s23
      %s27 = sphi 0, %s26
      %s43 = sphi 0, %s27
      %s47 = sphi 0, %s47
      %s49 = sphi 0, %s47
      %s50 = sphi 0, %s49
      %s64 = sphi 0, %s50
      %s68 = sphi 0, %s68
      %s70 = sphi 0, %s68
      %s71 = sphi 0, %s70
      %s85 = sphi 0, %s71
      %s89 = sphi 0, %s89
      %s91 = sphi 0, %s89
      %s92 = sphi 0, %s91
      %s106 = sphi 0, %s92
      %s112 = sphi 0, %s114
      %s115 = sphi 0, %s112
      %s116 = sphi 0, %s115
      %s132 = sphi 0, %s116
    $region4: #{tpu_custom_call.1} parent=1 // loop_header_branch
      %16 = sbr.rel (%p14) target = $region8
    $region5: #{tpu_custom_call.1} parent=1 // loop_body
      %s18 = ssub.s32 %s13, 1
      %s19 = ssub.s32 %s13, 2
      %s20 = sadd.s32 %s13, 1
      %s21 = ssub.s32 %s13, %s20
      %p22 = scmp.eq.s32.totalorder %s21, 0
      %s24 = sadd.s32 %s23, 1
      %s25 = scalar_select %p22, %s23, %s24
      %p28 = pneg %p22
      %p29 = scmp.eq.s32.totalorder %s13, 1
      %p30 = por %p28, %p29
      %p31 = scmp.ne.s32.totalorder %s23, %s26
      %p32 = scmp.eq.s32.totalorder %s13, 0
      %p33 = por %p31, %p32
      %p34 = scmp.ne.s32.totalorder %s23, %s26
      %p35 = scmp.eq.s32.totalorder %s18, 1
      %p36 = por %p34, %p35
      %p37 = scmp.ne.s32.totalorder %s26, %s27
      %p38 = scmp.eq.s32.totalorder %s18, 0
      %p39 = por %p37, %p38
      %p40 = scmp.ne.s32.totalorder %s26, %s27
      %p41 = scmp.eq.s32.totalorder %s19, 1
      %p42 = por %p40, %p41
      %p44 = scmp.ne.s32.totalorder %s27, %s43
      %p45 = scmp.eq.s32.totalorder %s19, 0
      %p46 = por %p44, %p45
      %s48 = sadd.s32 %s47, 1
      %p51 = scmp.eq.s32.totalorder %s13, 1
      %p52 = scmp.ne.s32.totalorder %s47, %s49
      %p53 = scmp.eq.s32.totalorder %s13, 0
      %p54 = por %p52, %p53
      %p55 = scmp.ne.s32.totalorder %s47, %s49
      %p56 = scmp.eq.s32.totalorder %s18, 1
      %p57 = por %p55, %p56
      %p58 = scmp.ne.s32.totalorder %s49, %s50
      %p59 = scmp.eq.s32.totalorder %s18, 0
      %p60 = por %p58, %p59
      %p61 = scmp.ne.s32.totalorder %s49, %s50
      %p62 = scmp.eq.s32.totalorder %s19, 1
      %p63 = por %p61, %p62
      %p65 = scmp.ne.s32.totalorder %s50, %s64
      %p66 = scmp.eq.s32.totalorder %s19, 0
      %p67 = por %p65, %p66
      %s69 = sadd.s32 %s68, 1
      %p72 = scmp.eq.s32.totalorder %s13, 1
      %p73 = scmp.ne.s32.totalorder %s68, %s70
      %p74 = scmp.eq.s32.totalorder %s13, 0
      %p75 = por %p73, %p74
      %p76 = scmp.ne.s32.totalorder %s68, %s70
      %p77 = scmp.eq.s32.totalorder %s18, 1
      %p78 = por %p76, %p77
      %p79 = scmp.ne.s32.totalorder %s70, %s71
      %p80 = scmp.eq.s32.totalorder %s18, 0
      %p81 = por %p79, %p80
      %p82 = scmp.ne.s32.totalorder %s70, %s71
      %p83 = scmp.eq.s32.totalorder %s19, 1
      %p84 = por %p82, %p83
      %p86 = scmp.ne.s32.totalorder %s71, %s85
      %p87 = scmp.eq.s32.totalorder %s19, 0
      %p88 = por %p86, %p87
      %s90 = sadd.s32 %s89, 1
      %p93 = scmp.eq.s32.totalorder %s13, 1
      %p94 = scmp.ne.s32.totalorder %s89, %s91
      %p95 = scmp.eq.s32.totalorder %s13, 0
      %p96 = por %p94, %p95
      %p97 = scmp.ne.s32.totalorder %s89, %s91
      %p98 = scmp.eq.s32.totalorder %s18, 1
      %p99 = por %p97, %p98
      %p100 = scmp.ne.s32.totalorder %s91, %s92
      %p101 = scmp.eq.s32.totalorder %s18, 0
      %p102 = por %p100, %p101
      %p103 = scmp.ne.s32.totalorder %s91, %s92
      %p104 = scmp.eq.s32.totalorder %s19, 1
      %p105 = por %p103, %p104
      %p107 = scmp.ne.s32.totalorder %s92, %s106
      %p108 = scmp.eq.s32.totalorder %s19, 0
      %p109 = por %p107, %p108
      %s110 = ssub.s32 %s13, %s20
      %p111 = scmp.eq.s32.totalorder %s110, 0
      %s113 = sadd.s32 %s112, 1
      %s114 = scalar_select %p111, %s112, %s113
      %p117 = pneg %p111
      %p118 = scmp.eq.s32.totalorder %s13, 1
      %p119 = por %p117, %p118
      %p120 = scmp.ne.s32.totalorder %s112, %s115
      %p121 = scmp.eq.s32.totalorder %s13, 0
      %p122 = por %p120, %p121
      %p123 = scmp.ne.s32.totalorder %s112, %s115
      %p124 = scmp.eq.s32.totalorder %s18, 1
      %p125 = por %p123, %p124
      %p126 = scmp.ne.s32.totalorder %s115, %s116
      %p127 = scmp.eq.s32.totalorder %s18, 0
      %p128 = por %p126, %p127
      %p129 = scmp.ne.s32.totalorder %s115, %s116
      %p130 = scmp.eq.s32.totalorder %s19, 1
      %p131 = por %p129, %p130
      %p133 = scmp.ne.s32.totalorder %s116, %s132
      %p134 = scmp.eq.s32.totalorder %s19, 0
      %p135 = por %p133, %p134
      %p136 = scmp.le.s32.totalorder 1, %s13
      %p137 = scmp.lt.s32.totalorder %s13, 3
      %p138 = pnand %p136, %p137
      %p139 = pneg %p138
      // Predicated region
      $region9: #{tpu_custom_call.1} parent=5 // pred_check
        _
      $region10: #{tpu_custom_call.1} parent=5 // pred_check_branch
        %141 = sbr.rel (%p138) target = $region12
      $region11: #{tpu_custom_call.1} parent=5 // pred_region
        %s142 = ssub.s32 %s13, 1
        // Predicated region
        $region13: #{tpu_custom_call.1} parent=11 // pred_check
          %p143 = pneg %p60
        $region14: #{tpu_custom_call.1} parent=11 // pred_check_branch
          %145 = sbr.rel (%p143) target = $region16
        $region15: #{tpu_custom_call.1} parent=11 // pred_region
          _
        $region16: #{tpu_custom_call.1} parent=11 // pred_fallthru
          _
        // Predicated region
        $region17: #{tpu_custom_call.1} parent=11 // pred_check
          %p146 = pneg %p81
        $region18: #{tpu_custom_call.1} parent=11 // pred_check_branch
          %148 = sbr.rel (%p146) target = $region20
        $region19: #{tpu_custom_call.1} parent=11 // pred_region
          _
        $region20: #{tpu_custom_call.1} parent=11 // pred_fallthru
          _
        // Predicated region
        $region21: #{tpu_custom_call.1} parent=11 // pred_check
          %p149 = pneg %p102
        $region22: #{tpu_custom_call.1} parent=11 // pred_check_branch
          %151 = sbr.rel (%p149) target = $region24
        $region23: #{tpu_custom_call.1} parent=11 // pred_region
          _
        $region24: #{tpu_custom_call.1} parent=11 // pred_fallthru
          _
      $region12: #{tpu_custom_call.1} parent=5 // pred_fallthru
        _
      %p152 = scmp.lt.s32.totalorder %s13, 2
      // Predicated region
      $region25: #{tpu_custom_call.1} parent=5 // pred_check
        %p153 = pneg %p152
      $region26: #{tpu_custom_call.1} parent=5 // pred_check_branch
        %155 = sbr.rel (%p153) target = $region28
      $region27: #{tpu_custom_call.1} parent=5 // pred_region
        // Predicated region
        $region29: #{tpu_custom_call.1} parent=27 // pred_check
          %p156 = pneg %p33
        $region30: #{tpu_custom_call.1} parent=27 // pred_check_branch
          %158 = sbr.rel (%p156) target = $region32
        $region31: #{tpu_custom_call.1} parent=27 // pred_region
          %s159 = smul.u32 16, %s13
          %p160 = scmp.lt.s32.totalorder %s159, 31
          %s161 = scalar_select %p160, %s159, 31
          %s162 = smul.addr %s161, 8
          %s163 = scalar_lea.vmem %s0, %s162
          %s164 = smul.u32 16, %s13
        $region32: #{tpu_custom_call.1} parent=27 // pred_fallthru
          _
      $region28: #{tpu_custom_call.1} parent=5 // pred_fallthru
        _
      %p165 = scmp.le.s32.totalorder 1, %s13
      %p166 = scmp.lt.s32.totalorder %s13, 3
      %p167 = pnand %p165, %p166
      %p168 = pneg %p167
      // Predicated region
      $region33: #{tpu_custom_call.1} parent=5 // pred_check
        _
      $region34: #{tpu_custom_call.1} parent=5 // pred_check_branch
        %170 = sbr.rel (%p167) target = $region36
      $region35: #{tpu_custom_call.1} parent=5 // pred_region
        %s171 = ssub.s32 %s13, 1
        %s172 = smul.u32 16, %s18
        %p173 = scmp.lt.s32.totalorder %s172, 31
        %s174 = scalar_select %p173, %s172, 31
        %s175 = smul.addr %s174, 8
        %s176 = scalar_lea.vmem %s0, %s175
        %p177 = pneg %p39
        %p178 = pneg %p36
        %p179 = pneg %p60
        %p180 = pneg %p57
        %p181 = pneg %p81
        %p182 = pneg %p78
        %p183 = pneg %p102
        %p184 = pneg %p99
        %p185 = pneg %p128
        %p186 = pneg %p125
        %s187 = sand.u32 %s115, 1
        %s188 = scalar_lea.sflag [#allocation3], %s187
        %s189 = sand.u32 %s115, 1
        %s190 = smul.addr %s189, 128
        %s191 = scalar_lea.vmem [#allocation2], %s190
        %s192 = smul.u32 16, %s18
        %p193 = scmp.lt.s32.totalorder %s192, 31
        %s194 = scalar_select %p193, %s192, 31
        %s195 = smul.addr %s194, 8
        %s196 = scalar_lea.vmem %s0, %s195
        %s197 = smul.u32 16, %s18
        %s198 = smul.u32 16, %s18
        %v199 = vld [vmem:[%s196] sm:$0xff]
        %v200 = vld [vmem:[%s196 + $0x8] sm:$0xff]
        %v201 = vld [vmem:[%s196 + $0x10] sm:$0xff]
        %v202 = vld [vmem:[%s196 + $0x18] sm:$0xff]
        %v203 = vld [vmem:[%s196 + $0x20] sm:$0xff]
        %v204 = vld [vmem:[%s196 + $0x28] sm:$0xff]
        %v205 = vld [vmem:[%s196 + $0x30] sm:$0xff]
        %v206 = vld [vmem:[%s196 + $0x38] sm:$0xff]
        %v207 = vld [vmem:[%s196 + $0x40] sm:$0xff]
        %v208 = vld [vmem:[%s196 + $0x48] sm:$0xff]
        %v209 = vld [vmem:[%s196 + $0x50] sm:$0xff]
        %v210 = vld [vmem:[%s196 + $0x58] sm:$0xff]
        %v211 = vld [vmem:[%s196 + $0x60] sm:$0xff]
        %v212 = vld [vmem:[%s196 + $0x68] sm:$0xff]
        %v213 = vld [vmem:[%s196 + $0x70] sm:$0xff]
        %v214 = vld [vmem:[%s196 + $0x78] sm:$0xff]
        %v215 = vlaneseq
        %v216 = vand.u32 %v215, 127
        %217 = vset.pattern.permute.xlu0 0
        %218 = vperm.xlu0 %217, %v199
        %v219 = vpop.permute.xlu0 %218
        %220 = vset.pattern.permute.xlu0 0
        %221 = vperm.xlu0 %220, %v200
        %v222 = vpop.permute.xlu0 %221
        %223 = vset.pattern.permute.xlu0 0
        %224 = vperm.xlu0 %223, %v201
        %v225 = vpop.permute.xlu0 %224
        %226 = vset.pattern.permute.xlu0 0
        %227 = vperm.xlu0 %226, %v202
        %v228 = vpop.permute.xlu0 %227
        %229 = vset.pattern.permute.xlu0 0
        %230 = vperm.xlu0 %229, %v203
        %v231 = vpop.permute.xlu0 %230
        %232 = vset.pattern.permute.xlu0 0
        %233 = vperm.xlu0 %232, %v204
        %v234 = vpop.permute.xlu0 %233
        %235 = vset.pattern.permute.xlu0 0
        %236 = vperm.xlu0 %235, %v205
        %v237 = vpop.permute.xlu0 %236
        %238 = vset.pattern.permute.xlu0 0
        %239 = vperm.xlu0 %238, %v206
        %v240 = vpop.permute.xlu0 %239
        %241 = vset.pattern.permute.xlu0 0
        %242 = vperm.xlu0 %241, %v207
        %v243 = vpop.permute.xlu0 %242
        %244 = vset.pattern.permute.xlu0 0
        %245 = vperm.xlu0 %244, %v208
        %v246 = vpop.permute.xlu0 %245
        %247 = vset.pattern.permute.xlu0 0
        %248 = vperm.xlu0 %247, %v209
        %v249 = vpop.permute.xlu0 %248
        %250 = vset.pattern.permute.xlu0 0
        %251 = vperm.xlu0 %250, %v210
        %v252 = vpop.permute.xlu0 %251
        %253 = vset.pattern.permute.xlu0 0
        %254 = vperm.xlu0 %253, %v211
        %v255 = vpop.permute.xlu0 %254
        %256 = vset.pattern.permute.xlu0 0
        %257 = vperm.xlu0 %256, %v212
        %v258 = vpop.permute.xlu0 %257
        %259 = vset.pattern.permute.xlu0 0
        %260 = vperm.xlu0 %259, %v213
        %v261 = vpop.permute.xlu0 %260
        %262 = vset.pattern.permute.xlu0 0
        %263 = vperm.xlu0 %262, %v214
        %v264 = vpop.permute.xlu0 %263
        %vm265 = vcmp.eq.s32.totalorder %v219, %v216
        %vm266 = vcmp.eq.s32.totalorder %v222, %v216
        %vm267 = vcmp.eq.s32.totalorder %v225, %v216
        %vm268 = vcmp.eq.s32.totalorder %v228, %v216
        %vm269 = vcmp.eq.s32.totalorder %v231, %v216
        %vm270 = vcmp.eq.s32.totalorder %v234, %v216
        %vm271 = vcmp.eq.s32.totalorder %v237, %v216
        %vm272 = vcmp.eq.s32.totalorder %v240, %v216
        %vm273 = vcmp.eq.s32.totalorder %v243, %v216
        %vm274 = vcmp.eq.s32.totalorder %v246, %v216
        %vm275 = vcmp.eq.s32.totalorder %v249, %v216
        %vm276 = vcmp.eq.s32.totalorder %v252, %v216
        %vm277 = vcmp.eq.s32.totalorder %v255, %v216
        %vm278 = vcmp.eq.s32.totalorder %v258, %v216
        %vm279 = vcmp.eq.s32.totalorder %v261, %v216
        %vm280 = vcmp.eq.s32.totalorder %v264, %v216
        %v281 = vsel %vm265, 1, 0
        %v282 = vsel %vm266, 1, 0
        %v283 = vsel %vm267, 1, 0
        %v284 = vsel %vm268, 1, 0
        %v285 = vsel %vm269, 1, 0
        %v286 = vsel %vm270, 1, 0
        %v287 = vsel %vm271, 1, 0
        %v288 = vsel %vm272, 1, 0
        %v289 = vsel %vm273, 1, 0
        %v290 = vsel %vm274, 1, 0
        %v291 = vsel %vm275, 1, 0
        %v292 = vsel %vm276, 1, 0
        %v293 = vsel %vm277, 1, 0
        %v294 = vsel %vm278, 1, 0
        %v295 = vsel %vm279, 1, 0
        %v296 = vsel %vm280, 1, 0
        %v297 = vcvt.s32.f32 %v281
        %v298 = vcvt.s32.f32 %v282
        %v299 = vcvt.s32.f32 %v283
        %v300 = vcvt.s32.f32 %v284
        %v301 = vcvt.s32.f32 %v285
        %v302 = vcvt.s32.f32 %v286
        %v303 = vcvt.s32.f32 %v287
        %v304 = vcvt.s32.f32 %v288
        %v305 = vcvt.s32.f32 %v289
        %v306 = vcvt.s32.f32 %v290
        %v307 = vcvt.s32.f32 %v291
        %v308 = vcvt.s32.f32 %v292
        %v309 = vcvt.s32.f32 %v293
        %v310 = vcvt.s32.f32 %v294
        %v311 = vcvt.s32.f32 %v295
        %v312 = vcvt.s32.f32 %v296
        %v313 = vld [vmem:[%s1] sm:$0xff]
        %v314 = vld [vmem:[%s1 + $0x8] sm:$0xff]
        %v315 = vld [vmem:[%s1 + $0x10] sm:$0xff]
        %v316 = vld [vmem:[%s1 + $0x18] sm:$0xff]
        %v317 = vld [vmem:[%s1 + $0x20] sm:$0xff]
        %v318 = vld [vmem:[%s1 + $0x28] sm:$0xff]
        %v319 = vld [vmem:[%s1 + $0x30] sm:$0xff]
        %v320 = vld [vmem:[%s1 + $0x38] sm:$0xff]
        %v321 = vld [vmem:[%s1 + $0x40] sm:$0xff]
        %v322 = vld [vmem:[%s1 + $0x48] sm:$0xff]
        %v323 = vld [vmem:[%s1 + $0x50] sm:$0xff]
        %v324 = vld [vmem:[%s1 + $0x58] sm:$0xff]
        %v325 = vld [vmem:[%s1 + $0x60] sm:$0xff]
        %v326 = vld [vmem:[%s1 + $0x68] sm:$0xff]
        %v327 = vld [vmem:[%s1 + $0x70] sm:$0xff]
        %v328 = vld [vmem:[%s1 + $0x78] sm:$0xff]
        %329 = vmatprep.subr.mxu0 0.0
        %330 = vmatpush1.msra.mxu0 %v313
        %331 = vmatprep.subr.mxu0 0.0
        %332 = vmatpush1.msra.mxu0 %v314
        %333 = vmatprep.subr.mxu0 0.0
        %334 = vmatpush1.msra.mxu0 %v315
        %335 = vmatprep.subr.mxu0 0.0
        %336 = vmatpush1.msra.mxu0 %v316
        %337 = vmatprep.subr.mxu0 0.0
        %338 = vmatpush1.msra.mxu0 %v317
        %339 = vmatprep.subr.mxu0 0.0
        %340 = vmatpush1.msra.mxu0 %v318
        %341 = vmatprep.subr.mxu0 0.0
        %342 = vmatpush1.msra.mxu0 %v319
        %343 = vmatprep.subr.mxu0 0.0
        %344 = vmatpush1.msra.mxu0 %v320
        %345 = vmatprep.subr.mxu0 0.0
        %346 = vmatpush1.msra.mxu0 %v321
        %347 = vmatprep.subr.mxu0 0.0
        %348 = vmatpush1.msra.mxu0 %v322
        %349 = vmatprep.subr.mxu0 0.0
        %350 = vmatpush1.msra.mxu0 %v323
        %351 = vmatprep.subr.mxu0 0.0
        %352 = vmatpush1.msra.mxu0 %v324
        %353 = vmatprep.subr.mxu0 0.0
        %354 = vmatpush1.msra.mxu0 %v325
        %355 = vmatprep.subr.mxu0 0.0
        %356 = vmatpush1.msra.mxu0 %v326
        %357 = vmatprep.subr.mxu0 0.0
        %358 = vmatpush1.msra.mxu0 %v327
        %359 = vmatprep.subr.mxu0 0.0
        %360 = vmatpush1.msra.mxu0 %v328
        %361 = vmatprep.subr.mxu0 0.0
        %362 = vmatpush1.msra.mxu0 0.0
        %363 = vmatprep.subr.mxu0 0.0
        %364 = vmatpush1.msra.mxu0 0.0
        %365 = vmatprep.subr.mxu0 0.0
        %366 = vmatpush1.msra.mxu0 0.0
        %367 = vmatprep.subr.mxu0 0.0
        %368 = vmatpush1.msra.mxu0 0.0
        %369 = vmatprep.subr.mxu0 0.0
        %370 = vmatpush1.msra.mxu0 0.0
        %371 = vmatprep.subr.mxu0 0.0
        %372 = vmatpush1.msra.mxu0 0.0
        %373 = vmatprep.subr.mxu0 0.0
        %374 = vmatpush1.msra.mxu0 0.0
        %375 = vmatprep.subr.mxu0 0.0
        %376 = vmatpush1.msra.mxu0 0.0
        %377 = vmatprep.subr.mxu0 0.0
        %378 = vmatpush1.msra.mxu0 0.0
        %379 = vmatprep.subr.mxu0 0.0
        %380 = vmatpush1.msra.mxu0 0.0
        %381 = vmatprep.subr.mxu0 0.0
        %382 = vmatpush1.msra.mxu0 0.0
        %383 = vmatprep.subr.mxu0 0.0
        %384 = vmatpush1.msra.mxu0 0.0
        %385 = vmatprep.subr.mxu0 0.0
        %386 = vmatpush1.msra.mxu0 0.0
        %387 = vmatprep.subr.mxu0 0.0
        %388 = vmatpush1.msra.mxu0 0.0
        %389 = vmatprep.subr.mxu0 0.0
        %390 = vmatpush1.msra.mxu0 0.0
        %391 = vmatprep.subr.mxu0 0.0
        %392 = vmatpush1.msra.mxu0 0.0
        %393 = vmatprep.mubr.f32.mxu0 0.0
        %394 = vmatmul.mubr.f32.gmra.mrb[0].mxu0 %v297
        %v395 = vpop.f32.mrb[0].mxu0
        %v396 = vadd.f32 0.0, %v395
        %v397 = vpop.f32.mrb[0].mxu0
        %398 = vmatprep.mubr.f32.mxu0 0.0
        %399 = vmatmul.mubr.f32.gmra.mrb[0].mxu0 %v298
        %v400 = vpop.f32.mrb[0].mxu0
        %v401 = vadd.f32 0.0, %v400
        %v402 = vpop.f32.mrb[0].mxu0
        %403 = vmatprep.mubr.f32.mxu0 0.0
        %404 = vmatmul.mubr.f32.gmra.mrb[0].mxu0 %v299
        %v405 = vpop.f32.mrb[0].mxu0
        %v406 = vadd.f32 0.0, %v405
        %v407 = vpop.f32.mrb[0].mxu0
        %408 = vmatprep.mubr.f32.mxu0 0.0
        %409 = vmatmul.mubr.f32.gmra.mrb[0].mxu0 %v300
        %v410 = vpop.f32.mrb[0].mxu0
        %v411 = vadd.f32 0.0, %v410
        %v412 = vpop.f32.mrb[0].mxu0
        %413 = vmatprep.mubr.f32.mxu0 0.0
        %414 = vmatmul.mubr.f32.gmra.mrb[0].mxu0 %v301
        %v415 = vpop.f32.mrb[0].mxu0
        %v416 = vadd.f32 0.0, %v415
        %v417 = vpop.f32.mrb[0].mxu0
        %418 = vmatprep.mubr.f32.mxu0 0.0
        %419 = vmatmul.mubr.f32.gmra.mrb[0].mxu0 %v302
        %v420 = vpop.f32.mrb[0].mxu0
        %v421 = vadd.f32 0.0, %v420
        %v422 = vpop.f32.mrb[0].mxu0
        %423 = vmatprep.mubr.f32.mxu0 0.0
        %424 = vmatmul.mubr.f32.gmra.mrb[0].mxu0 %v303
        %v425 = vpop.f32.mrb[0].mxu0
        %v426 = vadd.f32 0.0, %v425
        %v427 = vpop.f32.mrb[0].mxu0
        %428 = vmatprep.mubr.f32.mxu0 0.0
        %429 = vmatmul.mubr.f32.gmra.mrb[0].mxu0 %v304
        %v430 = vpop.f32.mrb[0].mxu0
        %v431 = vadd.f32 0.0, %v430
        %v432 = vpop.f32.mrb[0].mxu0
        %433 = vmatprep.mubr.f32.mxu0 0.0
        %434 = vmatmul.mubr.f32.gmra.mrb[0].mxu0 %v305
        %v435 = vpop.f32.mrb[0].mxu0
        %v436 = vadd.f32 0.0, %v435
        %v437 = vpop.f32.mrb[0].mxu0
        %438 = vmatprep.mubr.f32.mxu0 0.0
        %439 = vmatmul.mubr.f32.gmra.mrb[0].mxu0 %v306
        %v440 = vpop.f32.mrb[0].mxu0
        %v441 = vadd.f32 0.0, %v440
        %v442 = vpop.f32.mrb[0].mxu0
        %443 = vmatprep.mubr.f32.mxu0 0.0
        %444 = vmatmul.mubr.f32.gmra.mrb[0].mxu0 %v307
        %v445 = vpop.f32.mrb[0].mxu0
        %v446 = vadd.f32 0.0, %v445
        %v447 = vpop.f32.mrb[0].mxu0
        %448 = vmatprep.mubr.f32.mxu0 0.0
        %449 = vmatmul.mubr.f32.gmra.mrb[0].mxu0 %v308
        %v450 = vpop.f32.mrb[0].mxu0
        %v451 = vadd.f32 0.0, %v450
        %v452 = vpop.f32.mrb[0].mxu0
        %453 = vmatprep.mubr.f32.mxu0 0.0
        %454 = vmatmul.mubr.f32.gmra.mrb[0].mxu0 %v309
        %v455 = vpop.f32.mrb[0].mxu0
        %v456 = vadd.f32 0.0, %v455
        %v457 = vpop.f32.mrb[0].mxu0
        %458 = vmatprep.mubr.f32.mxu0 0.0
        %459 = vmatmul.mubr.f32.gmra.mrb[0].mxu0 %v310
        %v460 = vpop.f32.mrb[0].mxu0
        %v461 = vadd.f32 0.0, %v460
        %v462 = vpop.f32.mrb[0].mxu0
        %463 = vmatprep.mubr.f32.mxu0 0.0
        %464 = vmatmul.mubr.f32.gmra.mrb[0].mxu0 %v311
        %v465 = vpop.f32.mrb[0].mxu0
        %v466 = vadd.f32 0.0, %v465
        %v467 = vpop.f32.mrb[0].mxu0
        %468 = vmatprep.mubr.f32.mxu0 0.0
        %469 = vmatmul.mubr.f32.gmra.mrb[0].mxu0 %v312
        %v470 = vpop.f32.mrb[0].mxu0
        %v471 = vadd.f32 0.0, %v470
        %v472 = vpop.f32.mrb[0].mxu0
        %473 = vdwg.mxu0
        %v474 = vld [vmem:[%s2] sm:$0xff]
        %v475 = vld [vmem:[%s2 + $0x8] sm:$0xff]
        %v476 = vld [vmem:[%s2 + $0x10] sm:$0xff]
        %v477 = vld [vmem:[%s2 + $0x18] sm:$0xff]
        %v478 = vld [vmem:[%s2 + $0x20] sm:$0xff]
        %v479 = vld [vmem:[%s2 + $0x28] sm:$0xff]
        %v480 = vld [vmem:[%s2 + $0x30] sm:$0xff]
        %v481 = vld [vmem:[%s2 + $0x38] sm:$0xff]
        %v482 = vld [vmem:[%s2 + $0x40] sm:$0xff]
        %v483 = vld [vmem:[%s2 + $0x48] sm:$0xff]
        %v484 = vld [vmem:[%s2 + $0x50] sm:$0xff]
        %v485 = vld [vmem:[%s2 + $0x58] sm:$0xff]
        %v486 = vld [vmem:[%s2 + $0x60] sm:$0xff]
        %v487 = vld [vmem:[%s2 + $0x68] sm:$0xff]
        %v488 = vld [vmem:[%s2 + $0x70] sm:$0xff]
        %v489 = vld [vmem:[%s2 + $0x78] sm:$0xff]
        %v490 = vld [vmem:[%s3] sm:$0x1]
        %v492 = vlaneseq
        %v493 = vshrl.u32 %v492, 7
        %v494 = vsub.s32 0, %v493
        %v495 = vrot.slane %v490, %v494
        %497 = vmatprep.subr.mxu0 0.0
        %498 = vmatpush1.msra.mxu0 %v474
        %499 = vmatprep.subr.mxu0 0.0
        %500 = vmatpush1.msra.mxu0 %v475
        %501 = vmatprep.subr.mxu0 0.0
        %502 = vmatpush1.msra.mxu0 %v476
        %503 = vmatprep.subr.mxu0 0.0
        %504 = vmatpush1.msra.mxu0 %v477
        %505 = vmatprep.subr.mxu0 0.0
        %506 = vmatpush1.msra.mxu0 %v478
        %507 = vmatprep.subr.mxu0 0.0
        %508 = vmatpush1.msra.mxu0 %v479
        %509 = vmatprep.subr.mxu0 0.0
        %510 = vmatpush1.msra.mxu0 %v480
        %511 = vmatprep.subr.mxu0 0.0
        %512 = vmatpush1.msra.mxu0 %v481
        %513 = vmatprep.subr.mxu0 0.0
        %514 = vmatpush1.msra.mxu0 %v482
        %515 = vmatprep.subr.mxu0 0.0
        %516 = vmatpush1.msra.mxu0 %v483
        %517 = vmatprep.subr.mxu0 0.0
        %518 = vmatpush1.msra.mxu0 %v484
        %519 = vmatprep.subr.mxu0 0.0
        %520 = vmatpush1.msra.mxu0 %v485
        %521 = vmatprep.subr.mxu0 0.0
        %522 = vmatpush1.msra.mxu0 %v486
        %523 = vmatprep.subr.mxu0 0.0
        %524 = vmatpush1.msra.mxu0 %v487
        %525 = vmatprep.subr.mxu0 0.0
        %526 = vmatpush1.msra.mxu0 %v488
        %527 = vmatprep.subr.mxu0 0.0
        %528 = vmatpush1.msra.mxu0 %v489
        %529 = vmatprep.subr.mxu0 0.0
        %530 = vmatpush1.msra.mxu0 0.0
        %531 = vmatprep.subr.mxu0 0.0
        %532 = vmatpush1.msra.mxu0 0.0
        %533 = vmatprep.subr.mxu0 0.0
        %534 = vmatpush1.msra.mxu0 0.0
        %535 = vmatprep.subr.mxu0 0.0
        %536 = vmatpush1.msra.mxu0 0.0
        %537 = vmatprep.subr.mxu0 0.0
        %538 = vmatpush1.msra.mxu0 0.0
        %539 = vmatprep.subr.mxu0 0.0
        %540 = vmatpush1.msra.mxu0 0.0
        %541 = vmatprep.subr.mxu0 0.0
        %542 = vmatpush1.msra.mxu0 0.0
        %543 = vmatprep.subr.mxu0 0.0
        %544 = vmatpush1.msra.mxu0 0.0
        %545 = vmatprep.subr.mxu0 0.0
        %546 = vmatpush1.msra.mxu0 0.0
        %547 = vmatprep.subr.mxu0 0.0
        %548 = vmatpush1.msra.mxu0 0.0
        %549 = vmatprep.subr.mxu0 0.0
        %550 = vmatpush1.msra.mxu0 0.0
        %551 = vmatprep.subr.mxu0 0.0
        %552 = vmatpush1.msra.mxu0 0.0
        %553 = vmatprep.subr.mxu0 0.0
        %554 = vmatpush1.msra.mxu0 0.0
        %555 = vmatprep.subr.mxu0 0.0
        %556 = vmatpush1.msra.mxu0 0.0
        %557 = vmatprep.subr.mxu0 0.0
        %558 = vmatpush1.msra.mxu0 0.0
        %559 = vmatprep.subr.mxu0 0.0
        %560 = vmatpush1.msra.mxu0 0.0
        %561 = vmatprep.mubr.f32.mxu0 0.0
        %562 = vmatmul.mubr.f32.gmra.mrb[0].mxu0 %v396
        %v563 = vpop.f32.mrb[0].mxu0
        %v564 = vadd.f32 %v495, %v563
        %v565 = vpop.f32.mrb[0].mxu0
        %566 = vmatprep.mubr.f32.mxu0 0.0
        %567 = vmatmul.mubr.f32.gmra.mrb[0].mxu0 %v401
        %v568 = vpop.f32.mrb[0].mxu0
        %v569 = vadd.f32 %v495, %v568
        %v570 = vpop.f32.mrb[0].mxu0
        %571 = vmatprep.mubr.f32.mxu0 0.0
        %572 = vmatmul.mubr.f32.gmra.mrb[0].mxu0 %v406
        %v573 = vpop.f32.mrb[0].mxu0
        %v574 = vadd.f32 %v495, %v573
        %v575 = vpop.f32.mrb[0].mxu0
        %576 = vmatprep.mubr.f32.mxu0 0.0
        %577 = vmatmul.mubr.f32.gmra.mrb[0].mxu0 %v411
        %v578 = vpop.f32.mrb[0].mxu0
        %v579 = vadd.f32 %v495, %v578
        %v580 = vpop.f32.mrb[0].mxu0
        %581 = vmatprep.mubr.f32.mxu0 0.0
        %582 = vmatmul.mubr.f32.gmra.mrb[0].mxu0 %v416
        %v583 = vpop.f32.mrb[0].mxu0
        %v584 = vadd.f32 %v495, %v583
        %v585 = vpop.f32.mrb[0].mxu0
        %586 = vmatprep.mubr.f32.mxu0 0.0
        %587 = vmatmul.mubr.f32.gmra.mrb[0].mxu0 %v421
        %v588 = vpop.f32.mrb[0].mxu0
        %v589 = vadd.f32 %v495, %v588
        %v590 = vpop.f32.mrb[0].mxu0
        %591 = vmatprep.mubr.f32.mxu0 0.0
        %592 = vmatmul.mubr.f32.gmra.mrb[0].mxu0 %v426
        %v593 = vpop.f32.mrb[0].mxu0
        %v594 = vadd.f32 %v495, %v593
        %v595 = vpop.f32.mrb[0].mxu0
        %596 = vmatprep.mubr.f32.mxu0 0.0
        %597 = vmatmul.mubr.f32.gmra.mrb[0].mxu0 %v431
        %v598 = vpop.f32.mrb[0].mxu0
        %v599 = vadd.f32 %v495, %v598
        %v600 = vpop.f32.mrb[0].mxu0
        %601 = vmatprep.mubr.f32.mxu0 0.0
        %602 = vmatmul.mubr.f32.gmra.mrb[0].mxu0 %v436
        %v603 = vpop.f32.mrb[0].mxu0
        %v604 = vadd.f32 %v495, %v603
        %v605 = vpop.f32.mrb[0].mxu0
        %606 = vmatprep.mubr.f32.mxu0 0.0
        %607 = vmatmul.mubr.f32.gmra.mrb[0].mxu0 %v441
        %v608 = vpop.f32.mrb[0].mxu0
        %v609 = vadd.f32 %v495, %v608
        %v610 = vpop.f32.mrb[0].mxu0
        %611 = vmatprep.mubr.f32.mxu0 0.0
        %612 = vmatmul.mubr.f32.gmra.mrb[0].mxu0 %v446
        %v613 = vpop.f32.mrb[0].mxu0
        %v614 = vadd.f32 %v495, %v613
        %v615 = vpop.f32.mrb[0].mxu0
        %616 = vmatprep.mubr.f32.mxu0 0.0
        %617 = vmatmul.mubr.f32.gmra.mrb[0].mxu0 %v451
        %v618 = vpop.f32.mrb[0].mxu0
        %v619 = vadd.f32 %v495, %v618
        %v620 = vpop.f32.mrb[0].mxu0
        %621 = vmatprep.mubr.f32.mxu0 0.0
        %622 = vmatmul.mubr.f32.gmra.mrb[0].mxu0 %v456
        %v623 = vpop.f32.mrb[0].mxu0
        %v624 = vadd.f32 %v495, %v623
        %v625 = vpop.f32.mrb[0].mxu0
        %626 = vmatprep.mubr.f32.mxu0 0.0
        %627 = vmatmul.mubr.f32.gmra.mrb[0].mxu0 %v461
        %v628 = vpop.f32.mrb[0].mxu0
        %v629 = vadd.f32 %v495, %v628
        %v630 = vpop.f32.mrb[0].mxu0
        %631 = vmatprep.mubr.f32.mxu0 0.0
        %632 = vmatmul.mubr.f32.gmra.mrb[0].mxu0 %v466
        %v633 = vpop.f32.mrb[0].mxu0
        %v634 = vadd.f32 %v495, %v633
        %v635 = vpop.f32.mrb[0].mxu0
        %636 = vmatprep.mubr.f32.mxu0 0.0
        %637 = vmatmul.mubr.f32.gmra.mrb[0].mxu0 %v471
        %v638 = vpop.f32.mrb[0].mxu0
        %v639 = vadd.f32 %v495, %v638
        %v640 = vpop.f32.mrb[0].mxu0
        %641 = vdwg.mxu0
        %642 = vst [vmem:[%s191] sm:$0xff] %v564
        %643 = vst [vmem:[%s191 + $0x8] sm:$0xff] %v569
        %644 = vst [vmem:[%s191 + $0x10] sm:$0xff] %v574
        %645 = vst [vmem:[%s191 + $0x18] sm:$0xff] %v579
        %646 = vst [vmem:[%s191 + $0x20] sm:$0xff] %v584
        %647 = vst [vmem:[%s191 + $0x28] sm:$0xff] %v589
        %648 = vst [vmem:[%s191 + $0x30] sm:$0xff] %v594
        %649 = vst [vmem:[%s191 + $0x38] sm:$0xff] %v599
        %650 = vst [vmem:[%s191 + $0x40] sm:$0xff] %v604
        %651 = vst [vmem:[%s191 + $0x48] sm:$0xff] %v609
        %652 = vst [vmem:[%s191 + $0x50] sm:$0xff] %v614
        %653 = vst [vmem:[%s191 + $0x58] sm:$0xff] %v619
        %654 = vst [vmem:[%s191 + $0x60] sm:$0xff] %v624
        %655 = vst [vmem:[%s191 + $0x68] sm:$0xff] %v629
        %656 = vst [vmem:[%s191 + $0x70] sm:$0xff] %v634
        %657 = vst [vmem:[%s191 + $0x78] sm:$0xff] %v639
        %s658 = sand.u32 %s115, 1
        %s659 = scalar_lea.sflag [#allocation3], %s658
        %s660 = sand.u32 %s115, 1
        %s661 = smul.addr %s660, 128
        %s662 = scalar_lea.vmem [#allocation2], %s661
        // Predicated region
        $region37: #{tpu_custom_call.1} parent=35 // pred_check
          %p663 = pneg %p125
        $region38: #{tpu_custom_call.1} parent=35 // pred_check_branch
          %665 = sbr.rel (%p663) target = $region40
        $region39: #{tpu_custom_call.1} parent=35 // pred_region
          %s666 = smul.u32 16, %s18
          %s668 = ssub.s32 2048, 2048
          %669 = vsyncadd %s659, %s668
          %s670 = smul.addr %s666, 128
          %s671 = scalar_lea.hbm %s4, %s670
          %s672 = sshll.u32 %s662, 4
          %s673 = int_to_ptr.vmem [resolvable:$true] %s672
          %678 = dma.vmem_to_hbm [thread:$0]  %s673, 2048, %s671, %s659, 128, 128, 8
        $region40: #{tpu_custom_call.1} parent=35 // pred_fallthru
          _
      $region36: #{tpu_custom_call.1} parent=5 // pred_fallthru
        _
      %p679 = scmp.le.s32.totalorder 2, %s13
      // Predicated region
      $region41: #{tpu_custom_call.1} parent=5 // pred_check
        %p680 = pneg %p679
      $region42: #{tpu_custom_call.1} parent=5 // pred_check_branch
        %682 = sbr.rel (%p680) target = $region44
      $region43: #{tpu_custom_call.1} parent=5 // pred_region
        %s683 = ssub.s32 %s13, 2
        // Predicated region
        $region45: #{tpu_custom_call.1} parent=43 // pred_check
          %p684 = pneg %p131
        $region46: #{tpu_custom_call.1} parent=43 // pred_check_branch
          %686 = sbr.rel (%p684) target = $region48
        $region47: #{tpu_custom_call.1} parent=43 // pred_region
          %s687 = sand.u32 %s116, 1
          %s688 = scalar_lea.sflag [#allocation3], %s687
          %s689 = sand.u32 %s116, 1
          %s690 = smul.addr %s689, 128
          %s691 = scalar_lea.vmem [#allocation2], %s690
          %692 = dma.done %s688, 2048
        $region48: #{tpu_custom_call.1} parent=43 // pred_fallthru
          _
      $region44: #{tpu_custom_call.1} parent=5 // pred_fallthru
        _
    $region6: #{tpu_custom_call.1} parent=1 // loop_footer
      %s17 = sadd.s32 1, %s13
    $region7: #{tpu_custom_call.1} parent=1 // loop_footer_branch
      %12 = sbr.rel target = $region3
    $region8: #{tpu_custom_call.1} parent=1 // loop_exit
      _
    %693 = vsyncpa [#allocation3], 1
    %s694 = scalar_lea.sflag [#allocation3], 1
    %695 = vsyncpa %s694, 1

</llo_original>
